<compile_context>
chip_gen: v7x
topology: tpu7x:2x2x1
jax: 0.10.0
libtpu: 0.0.40
codegen_flags: <defaults>
</compile_context>

<pallas_src>
import math

import jax
import jax.numpy as jnp
from jax.experimental import pallas as pl
from jax.experimental.pallas import tpu as pltpu


def _mlp_kernel(xT_ref, w1_ref, b1_ref, w2_ref, b2_ref, oT_ref):
    """x^T:(D,tm) f32, W1:(H,D) bf16, b1:(H,1) f32, W2:(D,H) bf16, b2:(D,1) f32."""
    xT = xT_ref[...]                                   # (D, tm)  f32
    w1 = w1_ref[...]                                   # (H, D)   bf16
    b1 = b1_ref[...]                                   # (H, 1)   f32
    w2 = w2_ref[...]                                   # (D, H)   bf16
    b2 = b2_ref[...]                                   # (D, 1)   f32

    # Linear 1 + ReLU: h^T = relu(W1 @ x^T + b1) -- MXU dot, f32 accumulation.
    h = jnp.dot(w1, xT.astype(jnp.bfloat16),
                preferred_element_type=jnp.float32) + b1
    h = jnp.maximum(h, 0.0)

    # TODO(synk): nn.Dropout(0.1) is identity in eval mode; a training-mode
    # kernel would draw a keep-mask with pltpu.prng_seed / pltpu.prng_random_bits.

    # Linear 2: y^T = W2 @ h^T + b2 -- MXU dot, lane-dense (D, tm) store.
    oT_ref[...] = (jnp.dot(w2, h.astype(jnp.bfloat16),
                           preferred_element_type=jnp.float32) + b2
                   ).astype(oT_ref.dtype)


def mlp_forward(x, w1, b1, w2, b2, *, block_tokens=1024):
    """Eval-mode MLP forward: relu(x @ w1.T + b1) @ w2.T + b2.

    x : (..., d_model)
    w1: (hidden, d_model), b1: (hidden,)     -- PyTorch nn.Linear layout
    w2: (d_model, hidden), b2: (d_model,)
    """
    D = x.shape[-1]
    H = w1.shape[0]
    assert w1.shape == (H, D) and w2.shape == (D, H)
    assert b1.shape == (H,) and b2.shape == (D,)

    lead_shape = x.shape[:-1]
    xT = x.reshape(-1, D).astype(jnp.float32).T         # (D, M): tokens lane-dense
    M = xT.shape[1]

    # Weights in native (fout, fin) layout, bf16 for the MXU; biases as f32 columns.
    w1b = w1.astype(jnp.bfloat16)                        # (H, D)
    w2b = w2.astype(jnp.bfloat16)                        # (D, H)
    b1c = b1.reshape(H, 1).astype(jnp.float32)           # (H, 1)
    b2c = b2.reshape(D, 1).astype(jnp.float32)           # (D, 1)

    # Token-tile size (lane axis). Small inputs: one full-array block / one grid
    # step. Large inputs: 128-aligned tiles and at least 2 grid steps so the
    # "parallel" axis can be sharded across v7x's 2 TensorCores.
    if M <= 512:
        tm = M
    else:
        tm = min(block_tokens, 128 * pl.cdiv(pl.cdiv(M, 2), 128))
    grid = (pl.cdiv(M, tm),)

    out_T = pl.pallas_call(
        _mlp_kernel,
        out_shape=jax.ShapeDtypeStruct((D, M), jnp.float32),
        grid=grid,
        in_specs=[
            pl.BlockSpec((D, tm), lambda i: (0, i)),     # x^T token tile
            pl.BlockSpec((H, D), lambda i: (0, 0)),      # grid-invariant weights
            pl.BlockSpec((H, 1), lambda i: (0, 0)),
            pl.BlockSpec((D, H), lambda i: (0, 0)),
            pl.BlockSpec((D, 1), lambda i: (0, 0)),
        ],
        out_specs=pl.BlockSpec((D, tm), lambda i: (0, i)),
        compiler_params=pltpu.CompilerParams(
            dimension_semantics=("parallel",),
            # Tiles here are tiny; set the scoped limit explicitly so larger
            # d_model/hidden or block_tokens don't hit the 16/32 MiB default.
            vmem_limit_bytes=32 * 1024 * 1024,
        ),
    )(xT, w1b, b1c, w2b, b2c)
    # TODO(synk): for very large d_model*hidden the grid-invariant weights should
    # be streamed in H-tiles (trailing "arbitrary" axis + f32 accumulator scratch)
    # to fit v7x's 64 MiB VMEM; unnecessary at these sizes.

    return out_T.T.reshape(*lead_shape, D)


if __name__ == "__main__":
    key = jax.random.PRNGKey(0)
    k1, k2, k3, k4, kx, kx2 = jax.random.split(key, 6)

    d_model, hidden = 8, 100          # matches MLP(d_model, hiden=100)
    N, S = 2, 5                       # small batch / sequence

    # PyTorch nn.Linear default init: U(-1/sqrt(fan_in), 1/sqrt(fan_in))
    lim1 = 1.0 / math.sqrt(d_model)
    w1 = jax.random.uniform(k1, (hidden, d_model), jnp.float32, -lim1, lim1)
    b1 = jax.random.uniform(k2, (hidden,), jnp.float32, -lim1, lim1)
    lim2 = 1.0 / math.sqrt(hidden)
    w2 = jax.random.uniform(k3, (d_model, hidden), jnp.float32, -lim2, lim2)
    b2 = jax.random.uniform(k4, (d_model,), jnp.float32, -lim2, lim2)

    def ref_mlp(x):
        return jnp.maximum(x @ w1.T + b1, 0.0) @ w2.T + b2

    # --- small input: single full-array block, one grid step ---
    x = jax.random.normal(kx, (N, S, d_model), jnp.float32)
    out = mlp_forward(x, w1, b1, w2, b2)
    jax.block_until_ready(out)
    assert out.shape == x.shape
    assert bool(jnp.allclose(out, ref_mlp(x), atol=2e-2, rtol=2e-2))

    # --- larger input: >= 2 lane-aligned token tiles + masked edge block ---
    xl = jax.random.normal(kx2, (80, 9, d_model), jnp.float32)   # 720 tokens
    outl = mlp_forward(xl, w1, b1, w2, b2)
    jax.block_until_ready(outl)
    assert outl.shape == xl.shape
    assert bool(jnp.allclose(outl, ref_mlp(xl), atol=2e-2, rtol=2e-2))

    print("KERNEL_OK")
</pallas_src>

<mosaic_0001>
module attributes {stable_mosaic.version = 11 : i64} {
  func.func @_mlp_kernel(%arg0: i32, %arg1: memref<8x10xf32, #tpu.memory_space<vmem>>, %arg2: memref<100x8xbf16, #tpu.memory_space<vmem>>, %arg3: memref<100x1xf32, #tpu.memory_space<vmem>>, %arg4: memref<8x100xbf16, #tpu.memory_space<vmem>>, %arg5: memref<8x1xf32, #tpu.memory_space<vmem>>, %arg6: memref<8x10xf32, #tpu.memory_space<vmem>>) attributes {dimension_semantics = [#tpu.dimension_semantics<parallel>], iteration_bounds = array<i64: 1>, scalar_prefetch = 0 : i64, scratch_operands = 0 : i64, tpu.core_type = #tpu.core_type<tc>, window_params = [{transform_indices = @transform_0, window_bounds = array<i64: 8, 10>}, {pipeline_mode = #tpu.pipeline_mode<synchronous>, transform_indices = @transform_1, window_bounds = array<i64: 100, 8>}, {pipeline_mode = #tpu.pipeline_mode<synchronous>, transform_indices = @transform_2, window_bounds = array<i64: 100, 1>}, {pipeline_mode = #tpu.pipeline_mode<synchronous>, transform_indices = @transform_3, window_bounds = array<i64: 8, 100>}, {pipeline_mode = #tpu.pipeline_mode<synchronous>, transform_indices = @transform_4, window_bounds = array<i64: 8, 1>}, {transform_indices = @transform_5, window_bounds = array<i64: 8, 10>}]} {
    %c0 = arith.constant 0 : index
    %c0_0 = arith.constant 0 : index
    %0 = vector.load %arg1[%c0, %c0_0] : memref<8x10xf32, #tpu.memory_space<vmem>>, vector<8x10xf32>
    %c0_1 = arith.constant 0 : index
    %c0_2 = arith.constant 0 : index
    %1 = vector.load %arg2[%c0_1, %c0_2] : memref<100x8xbf16, #tpu.memory_space<vmem>>, vector<100x8xbf16>
    %c0_3 = arith.constant 0 : index
    %c0_4 = arith.constant 0 : index
    %2 = vector.load %arg3[%c0_3, %c0_4] : memref<100x1xf32, #tpu.memory_space<vmem>>, vector<100x1xf32>
    %c0_5 = arith.constant 0 : index
    %c0_6 = arith.constant 0 : index
    %3 = vector.load %arg4[%c0_5, %c0_6] : memref<8x100xbf16, #tpu.memory_space<vmem>>, vector<8x100xbf16>
    %c0_7 = arith.constant 0 : index
    %c0_8 = arith.constant 0 : index
    %4 = vector.load %arg5[%c0_7, %c0_8] : memref<8x1xf32, #tpu.memory_space<vmem>>, vector<8x1xf32>
    %5 = arith.truncf %0 : vector<8x10xf32> to vector<8x10xbf16>
    %cst = arith.constant dense<0.000000e+00> : vector<100x10xf32>
    %6 = tpu.matmul %1, %5, %cst {dimension_numbers = #tpu.dot_dimension_numbers<[1], [0], [0], [1], [0, 0, 1, 1], [], []>} : vector<100x8xbf16>, vector<8x10xbf16>, vector<100x10xf32> -> vector<100x10xf32>
    %7 = vector.broadcast %2 : vector<100x1xf32> to vector<100x10xf32>
    %8 = arith.addf %6, %7 : vector<100x10xf32>
    %cst_9 = arith.constant 0.000000e+00 : f32
    %9 = vector.broadcast %cst_9 : f32 to vector<100x10xf32>
    %10 = arith.maximumf %8, %9 : vector<100x10xf32>
    %11 = arith.truncf %10 : vector<100x10xf32> to vector<100x10xbf16>
    %cst_10 = arith.constant dense<0.000000e+00> : vector<8x10xf32>
    %12 = tpu.matmul %3, %11, %cst_10 {dimension_numbers = #tpu.dot_dimension_numbers<[1], [0], [0], [1], [0, 0, 1, 1], [], []>} : vector<8x100xbf16>, vector<100x10xbf16>, vector<8x10xf32> -> vector<8x10xf32>
    %13 = vector.broadcast %4 : vector<8x1xf32> to vector<8x10xf32>
    %14 = arith.addf %12, %13 : vector<8x10xf32>
    %c0_11 = arith.constant 0 : index
    %c0_12 = arith.constant 0 : index
    %15 = vector.load %arg6[%c0_11, %c0_12] : memref<8x10xf32, #tpu.memory_space<vmem>>, vector<8x10xf32>
    tpu.vector_store %arg6[%c0_11, %c0_12], %14 {strides = array<i32>} : memref<8x10xf32, #tpu.memory_space<vmem>>, vector<8x10xf32>,
    return
  }
  func.func @transform_0(%arg0: i32) -> (i32, i32) {
    %c0_i32 = arith.constant 0 : i32
    %c0_i32_0 = arith.constant 0 : i32
    return %c0_i32, %arg0 : i32, i32
  }
  func.func @transform_1(%arg0: i32) -> (i32, i32) {
    %c0_i32 = arith.constant 0 : i32
    %c0_i32_0 = arith.constant 0 : i32
    %c0_i32_1 = arith.constant 0 : i32
    return %c0_i32, %c0_i32_0 : i32, i32
  }
  func.func @transform_2(%arg0: i32) -> (i32, i32) {
    %c0_i32 = arith.constant 0 : i32
    %c0_i32_0 = arith.constant 0 : i32
    %c0_i32_1 = arith.constant 0 : i32
    return %c0_i32, %c0_i32_0 : i32, i32
  }
  func.func @transform_3(%arg0: i32) -> (i32, i32) {
    %c0_i32 = arith.constant 0 : i32
    %c0_i32_0 = arith.constant 0 : i32
    %c0_i32_1 = arith.constant 0 : i32
    return %c0_i32, %c0_i32_0 : i32, i32
  }
  func.func @transform_4(%arg0: i32) -> (i32, i32) {
    %c0_i32 = arith.constant 0 : i32
    %c0_i32_0 = arith.constant 0 : i32
    %c0_i32_1 = arith.constant 0 : i32
    return %c0_i32, %c0_i32_0 : i32, i32
  }
  func.func @transform_5(%arg0: i32) -> (i32, i32) {
    %c0_i32 = arith.constant 0 : i32
    %c0_i32_0 = arith.constant 0 : i32
    return %c0_i32, %arg0 : i32, i32
  }
}

</mosaic_0001>

<llo_original>
// kernel: tpu_custom_call.1
$region0: #{tpu_custom_call.1}
  #allocation0 [shape = 'u32[]', space=smem, size = 0x4, offset = 0x4, fixed_abs, tag = 'smem constant byte address 0x4 - core index']
  #allocation1 [shape = 'u32[144,128]{1,0:T(1,128)}', space=vmem, size = 0x12000, scoped, tag = 'internal scratch']
  %s0 = inlined_call_operand.vmem [shape: f32[8,10], index: 0, kind: input, shape index: {}]
  %s1 = inlined_call_operand.vmem [shape: bf16[100,8], index: 1, kind: input, shape index: {}]
  %s2 = inlined_call_operand.vmem [shape: f32[100,1], index: 2, kind: input, shape index: {}]
  %s3 = inlined_call_operand.vmem [shape: bf16[8,100], index: 3, kind: input, shape index: {}]
  %s4 = inlined_call_operand.vmem [shape: f32[8,1], index: 4, kind: input, shape index: {}]
  %s5 = inlined_call_operand.hbm [shape: f32[8,10], index: 5, kind: output, shape index: {}]
  %s6 = sld [smem:[#allocation0]]
  $region30: #{tpu_custom_call.1} parent=0
    _
  %s8 = ssub.s32 1, %s6
  %s9 = scalar_select 0, %s8, %s6
  $region1: #{tpu_custom_call.1} parent=0
    #allocation2 [shape = 'u8[4096]{0}', space=vmem, size = 0x1000, scoped, tag = 'output window, operand 0, single buffered']
    #allocation3 [shape = 's32[1]{0}', space=sflag, size = 0x4, scoped, tag = 'scoped memory for tpu_custom_call.1']
    %10 = vsyncpa [#allocation3], 0
    // Predicated region
    $region2: #{tpu_custom_call.1} parent=1 // pred_check
      _
    $region3: #{tpu_custom_call.1} parent=1 // pred_check_branch
      %12 = sbr.rel (0) target = $region5
    $region4: #{tpu_custom_call.1} parent=1 // pred_region
      _
    $region5: #{tpu_custom_call.1} parent=1 // pred_fallthru
      _
    // Predicated region
    $region6: #{tpu_custom_call.1} parent=1 // pred_check
      _
    $region7: #{tpu_custom_call.1} parent=1 // pred_check_branch
      %14 = sbr.rel (0) target = $region9
    $region8: #{tpu_custom_call.1} parent=1 // pred_region
      _
    $region9: #{tpu_custom_call.1} parent=1 // pred_fallthru
      _
    // Predicated region
    $region10: #{tpu_custom_call.1} parent=1 // pred_check
      _
    $region11: #{tpu_custom_call.1} parent=1 // pred_check_branch
      %16 = sbr.rel (0) target = $region13
    $region12: #{tpu_custom_call.1} parent=1 // pred_region
      _
    $region13: #{tpu_custom_call.1} parent=1 // pred_fallthru
      _
    // Predicated region
    $region14: #{tpu_custom_call.1} parent=1 // pred_check
      _
    $region15: #{tpu_custom_call.1} parent=1 // pred_check_branch
      %18 = sbr.rel (0) target = $region17
    $region16: #{tpu_custom_call.1} parent=1 // pred_region
      _
    $region17: #{tpu_custom_call.1} parent=1 // pred_fallthru
      _
    // Predicated region
    $region18: #{tpu_custom_call.1} parent=1 // pred_check
      _
    $region19: #{tpu_custom_call.1} parent=1 // pred_check_branch
      %20 = sbr.rel (0) target = $region21
    $region20: #{tpu_custom_call.1} parent=1 // pred_region
      _
    $region21: #{tpu_custom_call.1} parent=1 // pred_fallthru
      _
    %v22 = vld [vmem:[%s0] sm:$0xff]
    %v23 = vld [vmem:[%s1] sm:$0xf]
    %v24 = vld [vmem:[%s1 + $0x4] sm:$0xf]
    %v25 = vld [vmem:[%s1 + $0x8] sm:$0xf]
    %v26 = vld [vmem:[%s1 + $0xc] sm:$0xf]
    %v27 = vld [vmem:[%s1 + $0x10] sm:$0xf]
    %v28 = vld [vmem:[%s1 + $0x14] sm:$0xf]
    %v29 = vld [vmem:[%s1 + $0x18] sm:$0xf]
    %v30 = vld [vmem:[%s1 + $0x1c] sm:$0xf]
    %v31 = vld [vmem:[%s1 + $0x20] sm:$0xf]
    %v32 = vld [vmem:[%s1 + $0x24] sm:$0xf]
    %v33 = vld [vmem:[%s1 + $0x28] sm:$0xf]
    %v34 = vld [vmem:[%s1 + $0x2c] sm:$0xf]
    %v35 = vld [vmem:[%s1 + $0x30] sm:$0x3]
    %v36 = vld [vmem:[%s2] sm:$0xff]
    %v37 = vld [vmem:[%s2 + $0x8] sm:$0xff]
    %v38 = vld [vmem:[%s2 + $0x10] sm:$0xff]
    %v39 = vld [vmem:[%s2 + $0x18] sm:$0xff]
    %v40 = vld [vmem:[%s2 + $0x20] sm:$0xff]
    %v41 = vld [vmem:[%s2 + $0x28] sm:$0xff]
    %v42 = vld [vmem:[%s2 + $0x30] sm:$0xff]
    %v43 = vld [vmem:[%s2 + $0x38] sm:$0xff]
    %v44 = vld [vmem:[%s2 + $0x40] sm:$0xff]
    %v45 = vld [vmem:[%s2 + $0x48] sm:$0xff]
    %v46 = vld [vmem:[%s2 + $0x50] sm:$0xff]
    %v47 = vld [vmem:[%s2 + $0x58] sm:$0xff]
    %v48 = vld [vmem:[%s2 + $0x60] sm:$0xf]
    %v49 = vld [vmem:[%s3] sm:$0xf]
    %v50 = vld [vmem:[%s4] sm:$0xff]
    %v51 = vpack.c.bf16 %v22, %v22
    %53 = vset.pattern.permute.xlu0 0
    %54 = vperm.xlu0 %53, %v36
    %v55 = vpop.permute.xlu0 %54
    %58 = vset.pattern.permute.xlu0 0
    %59 = vperm.xlu0 %58, %v37
    %v60 = vpop.permute.xlu0 %59
    %63 = vset.pattern.permute.xlu0 0
    %64 = vperm.xlu0 %63, %v38
    %v65 = vpop.permute.xlu0 %64
    %68 = vset.pattern.permute.xlu0 0
    %69 = vperm.xlu0 %68, %v39
    %v70 = vpop.permute.xlu0 %69
    %73 = vset.pattern.permute.xlu0 0
    %74 = vperm.xlu0 %73, %v40
    %v75 = vpop.permute.xlu0 %74
    %78 = vset.pattern.permute.xlu0 0
    %79 = vperm.xlu0 %78, %v41
    %v80 = vpop.permute.xlu0 %79
    %83 = vset.pattern.permute.xlu0 0
    %84 = vperm.xlu0 %83, %v42
    %v85 = vpop.permute.xlu0 %84
    %88 = vset.pattern.permute.xlu0 0
    %89 = vperm.xlu0 %88, %v43
    %v90 = vpop.permute.xlu0 %89
    %93 = vset.pattern.permute.xlu0 0
    %94 = vperm.xlu0 %93, %v44
    %v95 = vpop.permute.xlu0 %94
    %98 = vset.pattern.permute.xlu0 0
    %99 = vperm.xlu0 %98, %v45
    %v100 = vpop.permute.xlu0 %99
    %103 = vset.pattern.permute.xlu0 0
    %104 = vperm.xlu0 %103, %v46
    %v105 = vpop.permute.xlu0 %104
    %108 = vset.pattern.permute.xlu0 0
    %109 = vperm.xlu0 %108, %v47
    %v110 = vpop.permute.xlu0 %109
    %113 = vset.pattern.permute.xlu0 0
    %114 = vperm.xlu0 %113, %v48
    %v115 = vpop.permute.xlu0 %114
    %v130 = vunpack.c.l.b16 %v23
    %v131 = vunpack.c.l.b16 %v24
    %v132 = vunpack.c.l.b16 %v25
    %v133 = vunpack.c.l.b16 %v26
    %v134 = vunpack.c.l.b16 %v27
    %v135 = vunpack.c.l.b16 %v28
    %v136 = vunpack.c.l.b16 %v29
    %v137 = vunpack.c.l.b16 %v30
    %v138 = vunpack.c.l.b16 %v31
    %v139 = vunpack.c.l.b16 %v32
    %v140 = vunpack.c.l.b16 %v33
    %v141 = vunpack.c.l.b16 %v34
    %v142 = vunpack.c.l.b16 %v35
    %v143 = vpack.c.b16 %v131, %v130
    %v144 = vpack.c.b16 %v133, %v132
    %v145 = vpack.c.b16 %v135, %v134
    %v146 = vpack.c.b16 %v137, %v136
    %v147 = vpack.c.b16 %v139, %v138
    %v148 = vpack.c.b16 %v141, %v140
    %v149 = vpack.c.b16 %v142, %v142
    %vm150 = vcmask 64512
    %v152 = vsel %vm150, %v143, 0
    %v155 = vsel %vm150, %v144, 0
    %v158 = vsel %vm150, %v145, 0
    %v161 = vsel %vm150, %v146, 0
    %v164 = vsel %vm150, %v147, 0
    %v167 = vsel %vm150, %v148, 0
    %v170 = vsel %vm150, %v149, 0
    %vm172 = vcmask 1043456
    %v174 = vsel %vm172, %v51, 0
    %176 = vmatprep.subr.bf16.mxu0 0
    %177 = vmatpush1.bf16.msra.mxu0 %v174
    %178 = vmatprep.subr.bf16.mxu0 0
    %179 = vmatpush1.bf16.msra.mxu0 0
    %180 = vmatprep.subr.bf16.mxu0 0
    %181 = vmatpush1.bf16.msra.mxu0 0
    %182 = vmatprep.subr.bf16.mxu0 0
    %183 = vmatpush1.bf16.msra.mxu0 0
    %184 = vmatprep.subr.bf16.mxu0 0
    %185 = vmatpush1.bf16.msra.mxu0 0
    %186 = vmatprep.subr.bf16.mxu0 0
    %187 = vmatpush1.bf16.msra.mxu0 0
    %188 = vmatprep.subr.bf16.mxu0 0
    %189 = vmatpush1.bf16.msra.mxu0 0
    %190 = vmatprep.subr.bf16.mxu0 0
    %191 = vmatpush1.bf16.msra.mxu0 0
    %192 = vmatprep.subr.bf16.mxu0 0
    %193 = vmatpush1.bf16.msra.mxu0 0
    %194 = vmatprep.subr.bf16.mxu0 0
    %195 = vmatpush1.bf16.msra.mxu0 0
    %196 = vmatprep.subr.bf16.mxu0 0
    %197 = vmatpush1.bf16.msra.mxu0 0
    %198 = vmatprep.subr.bf16.mxu0 0
    %199 = vmatpush1.bf16.msra.mxu0 0
    %200 = vmatprep.subr.bf16.mxu0 0
    %201 = vmatpush1.bf16.msra.mxu0 0
    %202 = vmatprep.subr.bf16.mxu0 0
    %203 = vmatpush1.bf16.msra.mxu0 0
    %204 = vmatprep.subr.bf16.mxu0 0
    %205 = vmatpush1.bf16.msra.mxu0 0
    %206 = vmatprep.subr.bf16.mxu0 0
    %207 = vmatpush1.bf16.msra.mxu0 0
    %208 = vmatprep.mubr.bf16.mxu0 0
    %209 = vmatmul.mubr.bf16.gmra.mrb[0].mxu0 %v152
    %v210 = vpop.f32.mrb[0].mxu0
    %v211 = vadd.f32 %v55, %v210
    %v212 = vpop.f32.mrb[0].mxu0
    %v213 = vpop.f32.mrb[0].mxu0
    %v214 = vadd.f32 %v60, %v213
    %v215 = vpop.f32.mrb[0].mxu0
    %216 = vmatprep.mubr.bf16.mxu0 0
    %217 = vmatmul.mubr.bf16.gmra.mrb[0].mxu0 %v155
    %v218 = vpop.f32.mrb[0].mxu0
    %v219 = vadd.f32 %v65, %v218
    %v220 = vpop.f32.mrb[0].mxu0
    %v221 = vpop.f32.mrb[0].mxu0
    %v222 = vadd.f32 %v70, %v221
    %v223 = vpop.f32.mrb[0].mxu0
    %224 = vmatprep.mubr.bf16.mxu0 0
    %225 = vmatmul.mubr.bf16.gmra.mrb[0].mxu0 %v158
    %v226 = vpop.f32.mrb[0].mxu0
    %v227 = vadd.f32 %v75, %v226
    %v228 = vpop.f32.mrb[0].mxu0
    %v229 = vpop.f32.mrb[0].mxu0
    %v230 = vadd.f32 %v80, %v229
    %v231 = vpop.f32.mrb[0].mxu0
    %232 = vmatprep.mubr.bf16.mxu0 0
    %233 = vmatmul.mubr.bf16.gmra.mrb[0].mxu0 %v161
    %v234 = vpop.f32.mrb[0].mxu0
    %v235 = vadd.f32 %v85, %v234
    %v236 = vpop.f32.mrb[0].mxu0
    %v237 = vpop.f32.mrb[0].mxu0
    %v238 = vadd.f32 %v90, %v237
    %v239 = vpop.f32.mrb[0].mxu0
    %240 = vmatprep.mubr.bf16.mxu0 0
    %241 = vmatmul.mubr.bf16.gmra.mrb[0].mxu0 %v164
    %v242 = vpop.f32.mrb[0].mxu0
    %v243 = vadd.f32 %v95, %v242
    %v244 = vpop.f32.mrb[0].mxu0
    %v245 = vpop.f32.mrb[0].mxu0
    %v246 = vadd.f32 %v100, %v245
    %v247 = vpop.f32.mrb[0].mxu0
    %248 = vmatprep.mubr.bf16.mxu0 0
    %249 = vmatmul.mubr.bf16.gmra.mrb[0].mxu0 %v167
    %v250 = vpop.f32.mrb[0].mxu0
    %v251 = vadd.f32 %v105, %v250
    %v252 = vpop.f32.mrb[0].mxu0
    %v253 = vpop.f32.mrb[0].mxu0
    %v254 = vadd.f32 %v110, %v253
    %v255 = vpop.f32.mrb[0].mxu0
    %256 = vmatprep.mubr.bf16.mxu0 0
    %257 = vmatmul.mubr.bf16.gmra.mrb[0].mxu0 %v170
    %v258 = vpop.f32.mrb[0].mxu0
    %v259 = vadd.f32 %v115, %v258
    %v260 = vpop.f32.mrb[0].mxu0
    %v261 = vpop.f32.mrb[0].mxu0
    %v262 = vpop.f32.mrb[0].mxu0
    %263 = vdwg.mxu0
    %v264 = vmax.f32 %v211, 0.0
    %v265 = vmax.f32 %v214, 0.0
    %v266 = vmax.f32 %v219, 0.0
    %v267 = vmax.f32 %v222, 0.0
    %v268 = vmax.f32 %v227, 0.0
    %v269 = vmax.f32 %v230, 0.0
    %v270 = vmax.f32 %v235, 0.0
    %v271 = vmax.f32 %v238, 0.0
    %v272 = vmax.f32 %v243, 0.0
    %v273 = vmax.f32 %v246, 0.0
    %v274 = vmax.f32 %v251, 0.0
    %v275 = vmax.f32 %v254, 0.0
    %v276 = vmax.f32 %v259, 0.0
    %v277 = vpack.c.bf16 %v265, %v264
    %v278 = vpack.c.bf16 %v267, %v266
    %v279 = vpack.c.bf16 %v269, %v268
    %v280 = vpack.c.bf16 %v271, %v270
    %v281 = vpack.c.bf16 %v273, %v272
    %v282 = vpack.c.bf16 %v275, %v274
    %v283 = vpack.c.bf16 %v276, %v276
    %285 = vset.pattern.permute.xlu0 0
    %286 = vperm.xlu0 %285, %v50
    %v287 = vpop.permute.xlu0 %286
    %vm289 = vcmask 818176
    %v291 = vsel %vm289, %v49, 0
    %vm293 = vcmask 1041408
    %v295 = vsel %vm293, %v283, 0
    %297 = vmatprep.subr.bf16.mxu0 0
    %298 = vmatpush1.bf16.msra.mxu0 %v277
    %299 = vmatprep.subr.bf16.mxu0 0
    %300 = vmatpush1.bf16.msra.mxu0 %v278
    %301 = vmatprep.subr.bf16.mxu0 0
    %302 = vmatpush1.bf16.msra.mxu0 %v279
    %303 = vmatprep.subr.bf16.mxu0 0
    %304 = vmatpush1.bf16.msra.mxu0 %v280
    %305 = vmatprep.subr.bf16.mxu0 0
    %306 = vmatpush1.bf16.msra.mxu0 %v281
    %307 = vmatprep.subr.bf16.mxu0 0
    %308 = vmatpush1.bf16.msra.mxu0 %v282
    %309 = vmatprep.subr.bf16.mxu0 0
    %310 = vmatpush1.bf16.msra.mxu0 %v295
    %311 = vmatprep.subr.bf16.mxu0 0
    %312 = vmatpush1.bf16.msra.mxu0 0
    %313 = vmatprep.subr.bf16.mxu0 0
    %314 = vmatpush1.bf16.msra.mxu0 0
    %315 = vmatprep.subr.bf16.mxu0 0
    %316 = vmatpush1.bf16.msra.mxu0 0
    %317 = vmatprep.subr.bf16.mxu0 0
    %318 = vmatpush1.bf16.msra.mxu0 0
    %319 = vmatprep.subr.bf16.mxu0 0
    %320 = vmatpush1.bf16.msra.mxu0 0
    %321 = vmatprep.subr.bf16.mxu0 0
    %322 = vmatpush1.bf16.msra.mxu0 0
    %323 = vmatprep.subr.bf16.mxu0 0
    %324 = vmatpush1.bf16.msra.mxu0 0
    %325 = vmatprep.subr.bf16.mxu0 0
    %326 = vmatpush1.bf16.msra.mxu0 0
    %327 = vmatprep.subr.bf16.mxu0 0
    %328 = vmatpush1.bf16.msra.mxu0 0
    %329 = vmatprep.mubr.bf16.mxu0 0
    %330 = vmatmul.mubr.bf16.gmra.mrb[0].mxu0 %v291
    %v331 = vpop.f32.mrb[0].mxu0
    %v332 = vadd.f32 %v287, %v331
    %v333 = vpop.f32.mrb[0].mxu0
    %v334 = vpop.f32.mrb[0].mxu0
    %v335 = vpop.f32.mrb[0].mxu0
    %336 = vdwg.mxu0
    %vm337 = vcmask 80896
    %338 = vst.msk [vmem:[#allocation2] sm:$0xff] %vm337, %v332
    // Predicated region
    $region22: #{tpu_custom_call.1} parent=1 // pred_check
      _
    $region23: #{tpu_custom_call.1} parent=1 // pred_check_branch
      %340 = sbr.rel (0) target = $region25
    $region24: #{tpu_custom_call.1} parent=1 // pred_region
      %s342 = ssub.s32 128, 128
      %343 = vsyncadd [#allocation3], %s342
      %s345 = sshll.u32 [#allocation2], 4
      %s346 = int_to_ptr.vmem [resolvable:$true] %s345
      %348 = dma.vmem_to_hbm [thread:$0]  %s346, 128, %s5, [#allocation3]
    $region25: #{tpu_custom_call.1} parent=1 // pred_fallthru
      _
    // Predicated region
    $region26: #{tpu_custom_call.1} parent=1 // pred_check
      _
    $region27: #{tpu_custom_call.1} parent=1 // pred_check_branch
      %350 = sbr.rel (0) target = $region29
    $region28: #{tpu_custom_call.1} parent=1 // pred_region
      %351 = dma.done [#allocation3], 128
    $region29: #{tpu_custom_call.1} parent=1 // pred_fallthru
      _
    %352 = vsyncpa [#allocation3], 1

</llo_original>
